<compile_context>
chip_gen: v7x
topology: tpu7x:2x2x1
jax: 0.10.0
libtpu: 0.0.40
codegen_flags: <defaults>
</compile_context>

<pallas_src>
import numpy as np
import jax
import jax.numpy as jnp
from jax import lax
from jax.experimental import pallas as pl
from jax.experimental.pallas import tpu as pltpu


HIDDEN = 128
LOG_STD_MIN = -20.0
LOG_STD_MAX = 2.0


def _round_up(x, m):
    return ((x + m - 1) // m) * m


def _choose_tile_b(B, tile_b):
    """Pick the batch tile. Single full-batch block for small B; for B >= 512,
    a lane-dense multiple-of-128 tile giving >= 2 grid steps (v7x megacore)."""
    if B < 512 and B <= tile_b:
        return B                                  # block == full dim, always legal
    half = _round_up((B + 1) // 2, 128)           # >= 2 grid steps
    return max(128, min(tile_b, half))


def tanh_gaussian_kernel(state_ref, w0_ref, b0_ref, w1_ref, b1_ref,
                         wht_ref, bht_ref, noise_ref, out_ref):
    """One batch tile. Hidden layers are batch-major; head output is produced
    transposed (A in sublanes, batch in lanes) so the epilogue is un-padded."""
    a = out_ref.shape[0]          # static action size
    cdt = w0_ref.dtype            # matmul operand dtype (f32 or bf16)

    # FullyConnected([S, 128, 128]): hidden relu, then final linear (no act inside fc).
    h = jnp.dot(state_ref[...].astype(cdt), w0_ref[...],
                preferred_element_type=jnp.float32)
    h = jnp.maximum(h + b0_ref[...], 0.0)
    f = jnp.dot(h.astype(cdt), w1_ref[...],
                preferred_element_type=jnp.float32) + b1_ref[...]
    # TanhGaussian applies the activation to the fc output.
    x = jnp.maximum(f, 0.0)

    # Fused, transposed mean|log_std head:
    #   (2A, 128) . (TILE_B, 128)^T -> (2A, TILE_B)   == (x @ [Wm|Ws]).T
    heads_t = lax.dot_general(
        wht_ref[...], x.astype(cdt),
        dimension_numbers=(((1,), (1,)), ((), ())),
        preferred_element_type=jnp.float32) + bht_ref[...]

    mean = heads_t[:a, :]                                      # (A, TILE_B)
    log_std = jnp.clip(heads_t[a:, :], LOG_STD_MIN, LOG_STD_MAX)
    std = jnp.exp(log_std)

    # noise is (A, 1): per-action-dim scalar broadcast over the batch lanes.
    out_ref[...] = jnp.tanh(noise_ref[...] * std + mean)


def tanh_gaussian_forward(state, params, noise, *, tile_b=1024, use_bf16=False):
    """state: (B, S) f32; noise: (A,) / (1, A) f32; params: dict of f32 weights/biases.

    Returns (B, A) f32 actions. If use_bf16=True, matmul operands are bf16 with
    f32 accumulation (expect ~1e-3 deviation vs. the f32 reference).
    """
    B, S = state.shape
    A = params["wm"].shape[1]

    # --- fuse + transpose the two heads (once per call, outside the kernel) ---
    wh_t = jnp.concatenate([params["wm"].T, params["ws"].T], axis=0)        # (2A, 128)
    bh_t = jnp.concatenate([params["bm"], params["bs"]], axis=1).reshape(2 * A, 1)
    noise_t = jnp.reshape(noise, (A, 1)).astype(jnp.float32)                # (A, 1)

    compute_dtype = jnp.bfloat16 if use_bf16 else jnp.float32
    state_in = state.astype(compute_dtype)
    w0 = params["w0"].astype(compute_dtype)
    w1 = params["w1"].astype(compute_dtype)
    wh_t = wh_t.astype(compute_dtype)
    b0, b1 = params["b0"], params["b1"]                                     # f32

    # --- batch tiling: weights resident, state/out streamed per grid step ---
    TILE_B = _choose_tile_b(B, tile_b)
    grid = (pl.cdiv(B, TILE_B),)   # ragged last block: rows are computed & discarded

    resident = (w0, b0, w1, b1, wh_t, bh_t, noise_t)
    in_specs = [pl.BlockSpec((TILE_B, S), lambda i: (i, 0))] + \
               [pl.BlockSpec(a.shape, lambda i: (0, 0)) for a in resident]

    flops = 2 * B * (S * HIDDEN + HIDDEN * HIDDEN + HIDDEN * 2 * A)
    transcendentals = B * 2 * A                     # exp + tanh per real output element
    bytes_accessed = (state_in.size * state_in.dtype.itemsize
                      + sum(int(a.size) * a.dtype.itemsize for a in resident)
                      + A * B * 4)

    out_t = pl.pallas_call(
        tanh_gaussian_kernel,
        out_shape=jax.ShapeDtypeStruct((A, B), jnp.float32),   # transposed, un-padded
        grid=grid,
        in_specs=in_specs,
        out_specs=pl.BlockSpec((A, TILE_B), lambda i: (0, i)),
        compiler_params=pltpu.CompilerParams(
            dimension_semantics=("parallel",),          # megacore on v7x; no-op v5e/v6e
            vmem_limit_bytes=32 * 1024 * 1024),         # few-MiB actual need + headroom
        cost_estimate=pl.CostEstimate(
            flops=flops, transcendentals=transcendentals,
            bytes_accessed=bytes_accessed),
    )(state_in, *resident)

    return out_t.T                                      # (B, A)


def _orthogonal(key, fan_in, fan_out, scale=1.0):
    """Deterministic orthogonal init (mirrors nn.init.orthogonal_ semantics)."""
    rows, cols = max(fan_in, fan_out), min(fan_in, fan_out)
    a = jax.random.normal(key, (rows, cols), dtype=jnp.float32)
    q, r = jnp.linalg.qr(a)
    q = q * jnp.sign(jnp.diagonal(r))
    if fan_in < fan_out:
        q = q.T
    return (scale * q[:fan_in, :fan_out]).astype(jnp.float32)


def init_params(key, state_size, action_size):
    k0, k1, km, ks = jax.random.split(key, 4)
    return {
        # FullyConnected hidden layer (orthogonal, scale 1.0)
        "w0": _orthogonal(k0, state_size, HIDDEN, 1.0),
        "b0": jnp.zeros((1, HIDDEN), jnp.float32),
        # FullyConnected last layer: layer_init(..., 0.001)
        "w1": _orthogonal(k1, HIDDEN, HIDDEN, 0.001),
        "b1": jnp.zeros((1, HIDDEN), jnp.float32),
        # mean / log_std heads (orthogonal, scale 1.0)
        "wm": _orthogonal(km, HIDDEN, action_size, 1.0),
        "bm": jnp.zeros((1, action_size), jnp.float32),
        "ws": _orthogonal(ks, HIDDEN, action_size, 1.0),
        "bs": jnp.zeros((1, action_size), jnp.float32),
    }


def reference_forward(state, params, noise):
    """Pure-JAX reference matching the PyTorch forward."""
    h = jax.nn.relu(state @ params["w0"] + params["b0"])
    f = h @ params["w1"] + params["b1"]
    x = jax.nn.relu(f)
    mean = x @ params["wm"] + params["bm"]
    log_std = jnp.clip(x @ params["ws"] + params["bs"], LOG_STD_MIN, LOG_STD_MAX)
    std = jnp.exp(log_std)
    return jnp.tanh(jnp.reshape(noise, (1, -1)) * std + mean)


if __name__ == "__main__":
    STATE_SIZE, ACTION_SIZE = 32, 8

    key = jax.random.PRNGKey(0)
    k_param, k_state, k_state2, k_noise = jax.random.split(key, 4)

    params = init_params(k_param, STATE_SIZE, ACTION_SIZE)
    # One Normal(0, 1) sample of shape (action_size,), broadcast over the batch
    # (matches torch.distributions.Normal(0, ones(A)).sample() in the module).
    noise = jax.random.normal(k_noise, (1, ACTION_SIZE), dtype=jnp.float32)

    # 1) Small batch, f32 path (single grid step).
    state = jax.random.normal(k_state, (8, STATE_SIZE), dtype=jnp.float32)
    out = jax.block_until_ready(tanh_gaussian_forward(state, params, noise))
    ref = reference_forward(state, params, noise)
    np.testing.assert_allclose(np.asarray(out), np.asarray(ref), rtol=1e-5, atol=1e-5)

    # 2) Ragged batch, f32 path (2 grid steps + masked partial last block).
    state2 = jax.random.normal(k_state2, (520, STATE_SIZE), dtype=jnp.float32)
    out2 = jax.block_until_ready(tanh_gaussian_forward(state2, params, noise))
    ref2 = reference_forward(state2, params, noise)
    np.testing.assert_allclose(np.asarray(out2), np.asarray(ref2), rtol=1e-5, atol=1e-5)

    # 3) bf16-matmul path (f32 accumulation) -- looser tolerance by construction.
    out_bf16 = jax.block_until_ready(
        tanh_gaussian_forward(state, params, noise, use_bf16=True))
    np.testing.assert_allclose(np.asarray(out_bf16), np.asarray(ref), rtol=0, atol=2e-2)

    print("KERNEL_OK")
</pallas_src>

<mosaic_0001>
module attributes {stable_mosaic.version = 11 : i64} {
  func.func @tanh_gaussian_kernel(%arg0: i32, %arg1: memref<8x32xf32, #tpu.memory_space<vmem>>, %arg2: memref<32x128xf32, #tpu.memory_space<vmem>>, %arg3: memref<1x128xf32, #tpu.memory_space<vmem>>, %arg4: memref<128x128xf32, #tpu.memory_space<vmem>>, %arg5: memref<1x128xf32, #tpu.memory_space<vmem>>, %arg6: memref<16x128xf32, #tpu.memory_space<vmem>>, %arg7: memref<16x1xf32, #tpu.memory_space<vmem>>, %arg8: memref<8x1xf32, #tpu.memory_space<vmem>>, %arg9: memref<8x8xf32, #tpu.memory_space<vmem>>) attributes {dimension_semantics = [#tpu.dimension_semantics<parallel>], iteration_bounds = array<i64: 1>, scalar_prefetch = 0 : i64, scratch_operands = 0 : i64, tpu.core_type = #tpu.core_type<tc>, window_params = [{transform_indices = @transform_0, window_bounds = array<i64: 8, 32>}, {pipeline_mode = #tpu.pipeline_mode<synchronous>, transform_indices = @transform_1, window_bounds = array<i64: 32, 128>}, {pipeline_mode = #tpu.pipeline_mode<synchronous>, transform_indices = @transform_2, window_bounds = array<i64: 1, 128>}, {pipeline_mode = #tpu.pipeline_mode<synchronous>, transform_indices = @transform_3, window_bounds = array<i64: 128, 128>}, {pipeline_mode = #tpu.pipeline_mode<synchronous>, transform_indices = @transform_4, window_bounds = array<i64: 1, 128>}, {pipeline_mode = #tpu.pipeline_mode<synchronous>, transform_indices = @transform_5, window_bounds = array<i64: 16, 128>}, {pipeline_mode = #tpu.pipeline_mode<synchronous>, transform_indices = @transform_6, window_bounds = array<i64: 16, 1>}, {pipeline_mode = #tpu.pipeline_mode<synchronous>, transform_indices = @transform_7, window_bounds = array<i64: 8, 1>}, {transform_indices = @transform_8, window_bounds = array<i64: 8, 8>}]} {
    %c0 = arith.constant 0 : index
    %c0_0 = arith.constant 0 : index
    %0 = vector.load %arg1[%c0, %c0_0] : memref<8x32xf32, #tpu.memory_space<vmem>>, vector<8x32xf32>
    %c0_1 = arith.constant 0 : index
    %c0_2 = arith.constant 0 : index
    %1 = vector.load %arg2[%c0_1, %c0_2] : memref<32x128xf32, #tpu.memory_space<vmem>>, vector<32x128xf32>
    %cst = arith.constant dense<0.000000e+00> : vector<8x128xf32>
    %2 = tpu.matmul %0, %1, %cst {dimension_numbers = #tpu.dot_dimension_numbers<[1], [0], [0], [1], [0, 0, 1, 1], [], []>} : vector<8x32xf32>, vector<32x128xf32>, vector<8x128xf32> -> vector<8x128xf32>
    %c0_3 = arith.constant 0 : index
    %c0_4 = arith.constant 0 : index
    %3 = vector.load %arg3[%c0_3, %c0_4] : memref<1x128xf32, #tpu.memory_space<vmem>>, vector<1x128xf32>
    %4 = vector.broadcast %3 : vector<1x128xf32> to vector<8x128xf32>
    %5 = arith.addf %2, %4 : vector<8x128xf32>
    %cst_5 = arith.constant 0.000000e+00 : f32
    %6 = vector.broadcast %cst_5 : f32 to vector<8x128xf32>
    %7 = arith.maximumf %5, %6 : vector<8x128xf32>
    %c0_6 = arith.constant 0 : index
    %c0_7 = arith.constant 0 : index
    %8 = vector.load %arg4[%c0_6, %c0_7] : memref<128x128xf32, #tpu.memory_space<vmem>>, vector<128x128xf32>
    %cst_8 = arith.constant dense<0.000000e+00> : vector<8x128xf32>
    %9 = tpu.matmul %7, %8, %cst_8 {dimension_numbers = #tpu.dot_dimension_numbers<[1], [0], [0], [1], [0, 0, 1, 1], [], []>} : vector<8x128xf32>, vector<128x128xf32>, vector<8x128xf32> -> vector<8x128xf32>
    %c0_9 = arith.constant 0 : index
    %c0_10 = arith.constant 0 : index
    %10 = vector.load %arg5[%c0_9, %c0_10] : memref<1x128xf32, #tpu.memory_space<vmem>>, vector<1x128xf32>
    %11 = vector.broadcast %10 : vector<1x128xf32> to vector<8x128xf32>
    %12 = arith.addf %9, %11 : vector<8x128xf32>
    %cst_11 = arith.constant 0.000000e+00 : f32
    %13 = vector.broadcast %cst_11 : f32 to vector<8x128xf32>
    %14 = arith.maximumf %12, %13 : vector<8x128xf32>
    %c0_12 = arith.constant 0 : index
    %c0_13 = arith.constant 0 : index
    %15 = vector.load %arg6[%c0_12, %c0_13] : memref<16x128xf32, #tpu.memory_space<vmem>>, vector<16x128xf32>
    %cst_14 = arith.constant dense<0.000000e+00> : vector<16x8xf32>
    %16 = tpu.matmul %15, %14, %cst_14 {dimension_numbers = #tpu.dot_dimension_numbers<[1], [1], [0], [0], [0, 0, 1, 0], [], []>} : vector<16x128xf32>, vector<8x128xf32>, vector<16x8xf32> -> vector<16x8xf32>
    %c0_15 = arith.constant 0 : index
    %c0_16 = arith.constant 0 : index
    %17 = vector.load %arg7[%c0_15, %c0_16] : memref<16x1xf32, #tpu.memory_space<vmem>>, vector<16x1xf32>
    %18 = vector.broadcast %17 : vector<16x1xf32> to vector<16x8xf32>
    %19 = arith.addf %16, %18 : vector<16x8xf32>
    %20 = vector.extract_strided_slice %19 {offsets = [0, 0], sizes = [8, 8], strides = [1, 1]} : vector<16x8xf32> to vector<8x8xf32>
    %21 = vector.extract_strided_slice %19 {offsets = [8, 0], sizes = [8, 8], strides = [1, 1]} : vector<16x8xf32> to vector<8x8xf32>
    %cst_17 = arith.constant -2.000000e+01 : f32
    %cst_18 = arith.constant 2.000000e+00 : f32
    %22 = vector.broadcast %cst_17 : f32 to vector<8x8xf32>
    %23 = arith.maximumf %22, %21 : vector<8x8xf32>
    %24 = vector.broadcast %cst_18 : f32 to vector<8x8xf32>
    %25 = arith.minimumf %24, %23 : vector<8x8xf32>
    %26 = math.exp %25 : vector<8x8xf32>
    %c0_19 = arith.constant 0 : index
    %c0_20 = arith.constant 0 : index
    %27 = vector.load %arg8[%c0_19, %c0_20] : memref<8x1xf32, #tpu.memory_space<vmem>>, vector<8x1xf32>
    %28 = vector.broadcast %27 : vector<8x1xf32> to vector<8x8xf32>
    %29 = arith.mulf %28, %26 : vector<8x8xf32>
    %30 = arith.addf %29, %20 : vector<8x8xf32>
    %31 = math.tanh %30 : vector<8x8xf32>
    %c0_21 = arith.constant 0 : index
    %c0_22 = arith.constant 0 : index
    %32 = vector.load %arg9[%c0_21, %c0_22] : memref<8x8xf32, #tpu.memory_space<vmem>>, vector<8x8xf32>
    tpu.vector_store %arg9[%c0_21, %c0_22], %31 {strides = array<i32>} : memref<8x8xf32, #tpu.memory_space<vmem>>, vector<8x8xf32>,
    return
  }
  func.func @transform_0(%arg0: i32) -> (i32, i32) {
    %c0_i32 = arith.constant 0 : i32
    %c0_i32_0 = arith.constant 0 : i32
    return %arg0, %c0_i32 : i32, i32
  }
  func.func @transform_1(%arg0: i32) -> (i32, i32) {
    %c0_i32 = arith.constant 0 : i32
    %c0_i32_0 = arith.constant 0 : i32
    %c0_i32_1 = arith.constant 0 : i32
    return %c0_i32, %c0_i32_0 : i32, i32
  }
  func.func @transform_2(%arg0: i32) -> (i32, i32) {
    %c0_i32 = arith.constant 0 : i32
    %c0_i32_0 = arith.constant 0 : i32
    %c0_i32_1 = arith.constant 0 : i32
    return %c0_i32, %c0_i32_0 : i32, i32
  }
  func.func @transform_3(%arg0: i32) -> (i32, i32) {
    %c0_i32 = arith.constant 0 : i32
    %c0_i32_0 = arith.constant 0 : i32
    %c0_i32_1 = arith.constant 0 : i32
    return %c0_i32, %c0_i32_0 : i32, i32
  }
  func.func @transform_4(%arg0: i32) -> (i32, i32) {
    %c0_i32 = arith.constant 0 : i32
    %c0_i32_0 = arith.constant 0 : i32
    %c0_i32_1 = arith.constant 0 : i32
    return %c0_i32, %c0_i32_0 : i32, i32
  }
  func.func @transform_5(%arg0: i32) -> (i32, i32) {
    %c0_i32 = arith.constant 0 : i32
    %c0_i32_0 = arith.constant 0 : i32
    %c0_i32_1 = arith.constant 0 : i32
    return %c0_i32, %c0_i32_0 : i32, i32
  }
  func.func @transform_6(%arg0: i32) -> (i32, i32) {
    %c0_i32 = arith.constant 0 : i32
    %c0_i32_0 = arith.constant 0 : i32
    %c0_i32_1 = arith.constant 0 : i32
    return %c0_i32, %c0_i32_0 : i32, i32
  }
  func.func @transform_7(%arg0: i32) -> (i32, i32) {
    %c0_i32 = arith.constant 0 : i32
    %c0_i32_0 = arith.constant 0 : i32
    %c0_i32_1 = arith.constant 0 : i32
    return %c0_i32, %c0_i32_0 : i32, i32
  }
  func.func @transform_8(%arg0: i32) -> (i32, i32) {
    %c0_i32 = arith.constant 0 : i32
    %c0_i32_0 = arith.constant 0 : i32
    return %c0_i32, %arg0 : i32, i32
  }
}

</mosaic_0001>

<llo_original>
// kernel: tpu_custom_call.1
$region0: #{tpu_custom_call.1}
  #allocation0 [shape = 'u32[]', space=smem, size = 0x4, offset = 0x4, fixed_abs, tag = 'smem constant byte address 0x4 - core index']
  #allocation1 [shape = 'u32[144,128]{1,0:T(1,128)}', space=vmem, size = 0x12000, scoped, tag = 'internal scratch']
  %s0 = inlined_call_operand.vmem [shape: f32[8,32], index: 0, kind: input, shape index: {}]
  %s1 = inlined_call_operand.hbm [shape: f32[32,128], index: 1, kind: input, shape index: {}]
  %s2 = inlined_call_operand.vmem [shape: f32[1,128], index: 2, kind: input, shape index: {}]
  %s3 = inlined_call_operand.hbm [shape: f32[128,128], index: 3, kind: input, shape index: {}]
  %s4 = inlined_call_operand.vmem [shape: f32[1,128], index: 4, kind: input, shape index: {}]
  %s5 = inlined_call_operand.vmem [shape: f32[16,128], index: 5, kind: input, shape index: {}]
  %s6 = inlined_call_operand.vmem [shape: f32[16,1], index: 6, kind: input, shape index: {}]
  %s7 = inlined_call_operand.vmem [shape: f32[8,1], index: 7, kind: input, shape index: {}]
  %s8 = inlined_call_operand.hbm [shape: f32[8,8], index: 8, kind: output, shape index: {}]
  %s9 = sld [smem:[#allocation0]]
  $region50: #{tpu_custom_call.1} parent=0
    _
  %s11 = ssub.s32 1, %s9
  %s12 = scalar_select 0, %s11, %s9
  $region1: #{tpu_custom_call.1} parent=0
    #allocation2 [shape = 'u8[16384]{0}', space=vmem, size = 0x4000, scoped, tag = 'input window, operand 1, single buffered']
    #allocation3 [shape = 's32[1]{0}', space=sflag, size = 0x4, scoped, tag = 'scoped memory for tpu_custom_call.1']
    #allocation4 [shape = 's32[1]{0}', space=sflag, size = 0x4, scoped, tag = 'scoped memory for tpu_custom_call.1']
    #allocation5 [shape = 'u8[65536]{0}', space=vmem, size = 0x10000, scoped, tag = 'input window, operand 3, single buffered']
    #allocation6 [shape = 's32[1]{0}', space=sflag, size = 0x4, scoped, tag = 'scoped memory for tpu_custom_call.1']
    #allocation7 [shape = 'u8[4096]{0}', space=vmem, size = 0x1000, scoped, tag = 'output window, operand 0, single buffered']
    %13 = vsyncpa [#allocation3], 0
    %14 = vsyncpa [#allocation6], 0
    %15 = vsyncpa [#allocation4], 0
    // Predicated region
    $region2: #{tpu_custom_call.1} parent=1 // pred_check
      _
    $region3: #{tpu_custom_call.1} parent=1 // pred_check_branch
      %17 = sbr.rel (0) target = $region5
    $region4: #{tpu_custom_call.1} parent=1 // pred_region
      _
    $region5: #{tpu_custom_call.1} parent=1 // pred_fallthru
      _
    // Predicated region
    $region6: #{tpu_custom_call.1} parent=1 // pred_check
      _
    $region7: #{tpu_custom_call.1} parent=1 // pred_check_branch
      %19 = sbr.rel (0) target = $region9
    $region8: #{tpu_custom_call.1} parent=1 // pred_region
      %s21 = ssub.s32 512, 512
      %22 = vsyncadd [#allocation3], %s21
      %s23 = sshll.u32 [#allocation2], 4
      %s24 = int_to_ptr.vmem [resolvable:$true] %s23
      %29 = dma.hbm_to_vmem [thread:$0]  %s1, 512, %s24, [#allocation3], 128, 128, 8
    $region9: #{tpu_custom_call.1} parent=1 // pred_fallthru
      _
    // Predicated region
    $region10: #{tpu_custom_call.1} parent=1 // pred_check
      _
    $region11: #{tpu_custom_call.1} parent=1 // pred_check_branch
      %31 = sbr.rel (0) target = $region13
    $region12: #{tpu_custom_call.1} parent=1 // pred_region
      _
    $region13: #{tpu_custom_call.1} parent=1 // pred_fallthru
      _
    // Predicated region
    $region14: #{tpu_custom_call.1} parent=1 // pred_check
      _
    $region15: #{tpu_custom_call.1} parent=1 // pred_check_branch
      %33 = sbr.rel (0) target = $region17
    $region16: #{tpu_custom_call.1} parent=1 // pred_region
      %s35 = ssub.s32 2048, 2048
      %36 = vsyncadd [#allocation6], %s35
      %s37 = sshll.u32 [#allocation5], 4
      %s38 = int_to_ptr.vmem [resolvable:$true] %s37
      %43 = dma.hbm_to_vmem [thread:$0]  %s3, 2048, %s38, [#allocation6], 128, 128, 8
    $region17: #{tpu_custom_call.1} parent=1 // pred_fallthru
      _
    // Predicated region
    $region18: #{tpu_custom_call.1} parent=1 // pred_check
      _
    $region19: #{tpu_custom_call.1} parent=1 // pred_check_branch
      %45 = sbr.rel (0) target = $region21
    $region20: #{tpu_custom_call.1} parent=1 // pred_region
      _
    $region21: #{tpu_custom_call.1} parent=1 // pred_fallthru
      _
    // Predicated region
    $region22: #{tpu_custom_call.1} parent=1 // pred_check
      _
    $region23: #{tpu_custom_call.1} parent=1 // pred_check_branch
      %47 = sbr.rel (0) target = $region25
    $region24: #{tpu_custom_call.1} parent=1 // pred_region
      _
    $region25: #{tpu_custom_call.1} parent=1 // pred_fallthru
      _
    // Predicated region
    $region26: #{tpu_custom_call.1} parent=1 // pred_check
      _
    $region27: #{tpu_custom_call.1} parent=1 // pred_check_branch
      %49 = sbr.rel (0) target = $region29
    $region28: #{tpu_custom_call.1} parent=1 // pred_region
      _
    $region29: #{tpu_custom_call.1} parent=1 // pred_fallthru
      _
    // Predicated region
    $region30: #{tpu_custom_call.1} parent=1 // pred_check
      _
    $region31: #{tpu_custom_call.1} parent=1 // pred_check_branch
      %51 = sbr.rel (0) target = $region33
    $region32: #{tpu_custom_call.1} parent=1 // pred_region
      _
    $region33: #{tpu_custom_call.1} parent=1 // pred_fallthru
      _
    // Predicated region
    $region34: #{tpu_custom_call.1} parent=1 // pred_check
      _
    $region35: #{tpu_custom_call.1} parent=1 // pred_check_branch
      %53 = sbr.rel (0) target = $region37
    $region36: #{tpu_custom_call.1} parent=1 // pred_region
      %54 = dma.done [#allocation3], 512
    $region37: #{tpu_custom_call.1} parent=1 // pred_fallthru
      _
    // Predicated region
    $region38: #{tpu_custom_call.1} parent=1 // pred_check
      _
    $region39: #{tpu_custom_call.1} parent=1 // pred_check_branch
      %56 = sbr.rel (0) target = $region41
    $region40: #{tpu_custom_call.1} parent=1 // pred_region
      %57 = dma.done [#allocation6], 2048
    $region41: #{tpu_custom_call.1} parent=1 // pred_fallthru
      _
    %v58 = vld [vmem:[%s0] sm:$0xff]
    %v59 = vld [vmem:[#allocation2] sm:$0xff]
    %v60 = vld [vmem:[#allocation2 + $0x8] sm:$0xff]
    %v61 = vld [vmem:[#allocation2 + $0x10] sm:$0xff]
    %v62 = vld [vmem:[#allocation2 + $0x18] sm:$0xff]
    %v63 = vld [vmem:[%s2] sm:$0x1]
    %v65 = vlaneseq
    %v66 = vshrl.u32 %v65, 7
    %v67 = vsub.s32 0, %v66
    %v68 = vrot.slane %v63, %v67
    %vm70 = vcmask 261120
    %v72 = vsel %vm70, %v58, 0
    %74 = vmatprep.subr.mxu0 0.0
    %75 = vmatpush1.msra.mxu0 %v59
    %76 = vmatprep.subr.mxu0 0.0
    %77 = vmatpush1.msra.mxu0 %v60
    %78 = vmatprep.subr.mxu0 0.0
    %79 = vmatpush1.msra.mxu0 %v61
    %80 = vmatprep.subr.mxu0 0.0
    %81 = vmatpush1.msra.mxu0 %v62
    %82 = vmatprep.subr.mxu0 0.0
    %83 = vmatpush1.msra.mxu0 0.0
    %84 = vmatprep.subr.mxu0 0.0
    %85 = vmatpush1.msra.mxu0 0.0
    %86 = vmatprep.subr.mxu0 0.0
    %87 = vmatpush1.msra.mxu0 0.0
    %88 = vmatprep.subr.mxu0 0.0
    %89 = vmatpush1.msra.mxu0 0.0
    %90 = vmatprep.subr.mxu0 0.0
    %91 = vmatpush1.msra.mxu0 0.0
    %92 = vmatprep.subr.mxu0 0.0
    %93 = vmatpush1.msra.mxu0 0.0
    %94 = vmatprep.subr.mxu0 0.0
    %95 = vmatpush1.msra.mxu0 0.0
    %96 = vmatprep.subr.mxu0 0.0
    %97 = vmatpush1.msra.mxu0 0.0
    %98 = vmatprep.subr.mxu0 0.0
    %99 = vmatpush1.msra.mxu0 0.0
    %100 = vmatprep.subr.mxu0 0.0
    %101 = vmatpush1.msra.mxu0 0.0
    %102 = vmatprep.subr.mxu0 0.0
    %103 = vmatpush1.msra.mxu0 0.0
    %104 = vmatprep.subr.mxu0 0.0
    %105 = vmatpush1.msra.mxu0 0.0
    %106 = vmatprep.subr.mxu0 0.0
    %107 = vmatpush1.msra.mxu0 0.0
    %108 = vmatprep.subr.mxu0 0.0
    %109 = vmatpush1.msra.mxu0 0.0
    %110 = vmatprep.subr.mxu0 0.0
    %111 = vmatpush1.msra.mxu0 0.0
    %112 = vmatprep.subr.mxu0 0.0
    %113 = vmatpush1.msra.mxu0 0.0
    %114 = vmatprep.subr.mxu0 0.0
    %115 = vmatpush1.msra.mxu0 0.0
    %116 = vmatprep.subr.mxu0 0.0
    %117 = vmatpush1.msra.mxu0 0.0
    %118 = vmatprep.subr.mxu0 0.0
    %119 = vmatpush1.msra.mxu0 0.0
    %120 = vmatprep.subr.mxu0 0.0
    %121 = vmatpush1.msra.mxu0 0.0
    %122 = vmatprep.subr.mxu0 0.0
    %123 = vmatpush1.msra.mxu0 0.0
    %124 = vmatprep.subr.mxu0 0.0
    %125 = vmatpush1.msra.mxu0 0.0
    %126 = vmatprep.subr.mxu0 0.0
    %127 = vmatpush1.msra.mxu0 0.0
    %128 = vmatprep.subr.mxu0 0.0
    %129 = vmatpush1.msra.mxu0 0.0
    %130 = vmatprep.subr.mxu0 0.0
    %131 = vmatpush1.msra.mxu0 0.0
    %132 = vmatprep.subr.mxu0 0.0
    %133 = vmatpush1.msra.mxu0 0.0
    %134 = vmatprep.subr.mxu0 0.0
    %135 = vmatpush1.msra.mxu0 0.0
    %136 = vmatprep.subr.mxu0 0.0
    %137 = vmatpush1.msra.mxu0 0.0
    %138 = vmatprep.mubr.f32.mxu0 0.0
    %139 = vmatmul.mubr.f32.gmra.mrb[0].mxu0 %v72
    %v140 = vpop.f32.mrb[0].mxu0
    %v141 = vadd.f32 %v68, %v140
    %v142 = vpop.f32.mrb[0].mxu0
    %143 = vdwg.mxu0
    %v144 = vmax.f32 %v141, 0.0
    %v145 = vld [vmem:[#allocation5] sm:$0xff]
    %v146 = vld [vmem:[#allocation5 + $0x8] sm:$0xff]
    %v147 = vld [vmem:[#allocation5 + $0x10] sm:$0xff]
    %v148 = vld [vmem:[#allocation5 + $0x18] sm:$0xff]
    %v149 = vld [vmem:[#allocation5 + $0x20] sm:$0xff]
    %v150 = vld [vmem:[#allocation5 + $0x28] sm:$0xff]
    %v151 = vld [vmem:[#allocation5 + $0x30] sm:$0xff]
    %v152 = vld [vmem:[#allocation5 + $0x38] sm:$0xff]
    %v153 = vld [vmem:[#allocation5 + $0x40] sm:$0xff]
    %v154 = vld [vmem:[#allocation5 + $0x48] sm:$0xff]
    %v155 = vld [vmem:[#allocation5 + $0x50] sm:$0xff]
    %v156 = vld [vmem:[#allocation5 + $0x58] sm:$0xff]
    %v157 = vld [vmem:[#allocation5 + $0x60] sm:$0xff]
    %v158 = vld [vmem:[#allocation5 + $0x68] sm:$0xff]
    %v159 = vld [vmem:[#allocation5 + $0x70] sm:$0xff]
    %v160 = vld [vmem:[#allocation5 + $0x78] sm:$0xff]
    %v161 = vld [vmem:[%s4] sm:$0x1]
    %v163 = vlaneseq
    %v164 = vshrl.u32 %v163, 7
    %v165 = vsub.s32 0, %v164
    %v166 = vrot.slane %v161, %v165
    %168 = vmatprep.subr.mxu0 0.0
    %169 = vmatpush1.msra.mxu0 %v145
    %170 = vmatprep.subr.mxu0 0.0
    %171 = vmatpush1.msra.mxu0 %v146
    %172 = vmatprep.subr.mxu0 0.0
    %173 = vmatpush1.msra.mxu0 %v147
    %174 = vmatprep.subr.mxu0 0.0
    %175 = vmatpush1.msra.mxu0 %v148
    %176 = vmatprep.subr.mxu0 0.0
    %177 = vmatpush1.msra.mxu0 %v149
    %178 = vmatprep.subr.mxu0 0.0
    %179 = vmatpush1.msra.mxu0 %v150
    %180 = vmatprep.subr.mxu0 0.0
    %181 = vmatpush1.msra.mxu0 %v151
    %182 = vmatprep.subr.mxu0 0.0
    %183 = vmatpush1.msra.mxu0 %v152
    %184 = vmatprep.subr.mxu0 0.0
    %185 = vmatpush1.msra.mxu0 %v153
    %186 = vmatprep.subr.mxu0 0.0
    %187 = vmatpush1.msra.mxu0 %v154
    %188 = vmatprep.subr.mxu0 0.0
    %189 = vmatpush1.msra.mxu0 %v155
    %190 = vmatprep.subr.mxu0 0.0
    %191 = vmatpush1.msra.mxu0 %v156
    %192 = vmatprep.subr.mxu0 0.0
    %193 = vmatpush1.msra.mxu0 %v157
    %194 = vmatprep.subr.mxu0 0.0
    %195 = vmatpush1.msra.mxu0 %v158
    %196 = vmatprep.subr.mxu0 0.0
    %197 = vmatpush1.msra.mxu0 %v159
    %198 = vmatprep.subr.mxu0 0.0
    %199 = vmatpush1.msra.mxu0 %v160
    %200 = vmatprep.subr.mxu0 0.0
    %201 = vmatpush1.msra.mxu0 0.0
    %202 = vmatprep.subr.mxu0 0.0
    %203 = vmatpush1.msra.mxu0 0.0
    %204 = vmatprep.subr.mxu0 0.0
    %205 = vmatpush1.msra.mxu0 0.0
    %206 = vmatprep.subr.mxu0 0.0
    %207 = vmatpush1.msra.mxu0 0.0
    %208 = vmatprep.subr.mxu0 0.0
    %209 = vmatpush1.msra.mxu0 0.0
    %210 = vmatprep.subr.mxu0 0.0
    %211 = vmatpush1.msra.mxu0 0.0
    %212 = vmatprep.subr.mxu0 0.0
    %213 = vmatpush1.msra.mxu0 0.0
    %214 = vmatprep.subr.mxu0 0.0
    %215 = vmatpush1.msra.mxu0 0.0
    %216 = vmatprep.subr.mxu0 0.0
    %217 = vmatpush1.msra.mxu0 0.0
    %218 = vmatprep.subr.mxu0 0.0
    %219 = vmatpush1.msra.mxu0 0.0
    %220 = vmatprep.subr.mxu0 0.0
    %221 = vmatpush1.msra.mxu0 0.0
    %222 = vmatprep.subr.mxu0 0.0
    %223 = vmatpush1.msra.mxu0 0.0
    %224 = vmatprep.subr.mxu0 0.0
    %225 = vmatpush1.msra.mxu0 0.0
    %226 = vmatprep.subr.mxu0 0.0
    %227 = vmatpush1.msra.mxu0 0.0
    %228 = vmatprep.subr.mxu0 0.0
    %229 = vmatpush1.msra.mxu0 0.0
    %230 = vmatprep.subr.mxu0 0.0
    %231 = vmatpush1.msra.mxu0 0.0
    %232 = vmatprep.mubr.f32.mxu0 0.0
    %233 = vmatmul.mubr.f32.gmra.mrb[0].mxu0 %v144
    %v234 = vpop.f32.mrb[0].mxu0
    %v235 = vadd.f32 %v166, %v234
    %v236 = vpop.f32.mrb[0].mxu0
    %237 = vdwg.mxu0
    %v238 = vmax.f32 %v235, 0.0
    %v239 = vld [vmem:[%s5] sm:$0xff]
    %v240 = vld [vmem:[%s5 + $0x8] sm:$0xff]
    %v241 = vld [vmem:[%s6] sm:$0xff]
    %v242 = vld [vmem:[%s6 + $0x8] sm:$0xff]
    %244 = vset.pattern.permute.xlu0 0
    %245 = vperm.xlu0 %244, %v241
    %v246 = vpop.permute.xlu0 %245
    %249 = vset.pattern.permute.xlu0 0
    %250 = vperm.xlu0 %249, %v242
    %v251 = vpop.permute.xlu0 %250
    %253 = vmatprep.subr.mxu0 0.0
    %254 = vmatpush1.xpose.msra.mxu0 %v238
    %255 = vmatprep.subr.mxu0 0.0
    %256 = vmatpush1.xpose.msra.mxu0 0.0
    %257 = vmatprep.subr.mxu0 0.0
    %258 = vmatpush1.xpose.msra.mxu0 0.0
    %259 = vmatprep.subr.mxu0 0.0
    %260 = vmatpush1.xpose.msra.mxu0 0.0
    %261 = vmatprep.subr.mxu0 0.0
    %262 = vmatpush1.xpose.msra.mxu0 0.0
    %263 = vmatprep.subr.mxu0 0.0
    %264 = vmatpush1.xpose.msra.mxu0 0.0
    %265 = vmatprep.subr.mxu0 0.0
    %266 = vmatpush1.xpose.msra.mxu0 0.0
    %267 = vmatprep.subr.mxu0 0.0
    %268 = vmatpush1.xpose.msra.mxu0 0.0
    %269 = vmatprep.subr.mxu0 0.0
    %270 = vmatpush1.xpose.msra.mxu0 0.0
    %271 = vmatprep.subr.mxu0 0.0
    %272 = vmatpush1.xpose.msra.mxu0 0.0
    %273 = vmatprep.subr.mxu0 0.0
    %274 = vmatpush1.xpose.msra.mxu0 0.0
    %275 = vmatprep.subr.mxu0 0.0
    %276 = vmatpush1.xpose.msra.mxu0 0.0
    %277 = vmatprep.subr.mxu0 0.0
    %278 = vmatpush1.xpose.msra.mxu0 0.0
    %279 = vmatprep.subr.mxu0 0.0
    %280 = vmatpush1.xpose.msra.mxu0 0.0
    %281 = vmatprep.subr.mxu0 0.0
    %282 = vmatpush1.xpose.msra.mxu0 0.0
    %283 = vmatprep.subr.mxu0 0.0
    %284 = vmatpush1.xpose.msra.mxu0 0.0
    %285 = vmatprep.subr.mxu0 0.0
    %286 = vmatpush1.xpose.msra.mxu0 0.0
    %287 = vmatprep.subr.mxu0 0.0
    %288 = vmatpush1.xpose.msra.mxu0 0.0
    %289 = vmatprep.subr.mxu0 0.0
    %290 = vmatpush1.xpose.msra.mxu0 0.0
    %291 = vmatprep.subr.mxu0 0.0
    %292 = vmatpush1.xpose.msra.mxu0 0.0
    %293 = vmatprep.subr.mxu0 0.0
    %294 = vmatpush1.xpose.msra.mxu0 0.0
    %295 = vmatprep.subr.mxu0 0.0
    %296 = vmatpush1.xpose.msra.mxu0 0.0
    %297 = vmatprep.subr.mxu0 0.0
    %298 = vmatpush1.xpose.msra.mxu0 0.0
    %299 = vmatprep.subr.mxu0 0.0
    %300 = vmatpush1.xpose.msra.mxu0 0.0
    %301 = vmatprep.subr.mxu0 0.0
    %302 = vmatpush1.xpose.msra.mxu0 0.0
    %303 = vmatprep.subr.mxu0 0.0
    %304 = vmatpush1.xpose.msra.mxu0 0.0
    %305 = vmatprep.subr.mxu0 0.0
    %306 = vmatpush1.xpose.msra.mxu0 0.0
    %307 = vmatprep.subr.mxu0 0.0
    %308 = vmatpush1.xpose.msra.mxu0 0.0
    %309 = vmatprep.subr.mxu0 0.0
    %310 = vmatpush1.xpose.msra.mxu0 0.0
    %311 = vmatprep.subr.mxu0 0.0
    %312 = vmatpush1.xpose.msra.mxu0 0.0
    %313 = vmatprep.subr.mxu0 0.0
    %314 = vmatpush1.xpose.msra.mxu0 0.0
    %315 = vmatprep.subr.mxu0 0.0
    %316 = vmatpush1.xpose.msra.mxu0 0.0
    %317 = vmatprep.mubr.f32.mxu0 0.0
    %318 = vmatmul.mubr.f32.gmra.mrb[0].mxu0 %v239
    %v319 = vpop.f32.mrb[0].mxu0
    %v320 = vadd.f32 %v246, %v319
    %v321 = vpop.f32.mrb[0].mxu0
    %322 = vmatprep.mubr.f32.mxu0 0.0
    %323 = vmatmul.mubr.f32.gmra.mrb[0].mxu0 %v240
    %v324 = vpop.f32.mrb[0].mxu0
    %v325 = vadd.f32 %v251, %v324
    %v326 = vpop.f32.mrb[0].mxu0
    %327 = vdwg.mxu0
    %v328 = vmax.f32 %v325, -20.0
    %v329 = vmin.f32 %v328, 2.0
    %v330 = vmul.f32 %v329, 1.442695
    %v331 = vpow.pop %v330
    %v332 = vld [vmem:[%s7] sm:$0xff]
    %334 = vset.pattern.permute.xlu0 0
    %335 = vperm.xlu0 %334, %v332
    %v336 = vpop.permute.xlu0 %335
    %v338 = vmul.f32 %v336, %v331
    %v339 = vadd.f32 %v338, %v320
    %v340 = vtanh.pop %v339
    %vm341 = vcmask 64512
    %342 = vst.msk [vmem:[#allocation7] sm:$0xff] %vm341, %v340
    // Predicated region
    $region42: #{tpu_custom_call.1} parent=1 // pred_check
      _
    $region43: #{tpu_custom_call.1} parent=1 // pred_check_branch
      %344 = sbr.rel (0) target = $region45
    $region44: #{tpu_custom_call.1} parent=1 // pred_region
      %s346 = ssub.s32 128, 128
      %347 = vsyncadd [#allocation4], %s346
      %s349 = sshll.u32 [#allocation7], 4
      %s350 = int_to_ptr.vmem [resolvable:$true] %s349
      %352 = dma.vmem_to_hbm [thread:$0]  %s350, 128, %s8, [#allocation4]
    $region45: #{tpu_custom_call.1} parent=1 // pred_fallthru
      _
    // Predicated region
    $region46: #{tpu_custom_call.1} parent=1 // pred_check
      _
    $region47: #{tpu_custom_call.1} parent=1 // pred_check_branch
      %354 = sbr.rel (0) target = $region49
    $region48: #{tpu_custom_call.1} parent=1 // pred_region
      %355 = dma.done [#allocation4], 128
    $region49: #{tpu_custom_call.1} parent=1 // pred_fallthru
      _
    %356 = vsyncpa [#allocation3], 1
    %357 = vsyncpa [#allocation6], 1
    %358 = vsyncpa [#allocation4], 1

</llo_original>
